<compile_context>
chip_gen: v5e
topology: v5e:2x2
jax: 0.10.0
libtpu: 0.0.40
codegen_flags: <defaults>
</compile_context>

<pallas_src>
import functools

import jax
import jax.numpy as jnp
from jax.experimental import pallas as pl
from jax.experimental.pallas import tpu as pltpu


LANES = 128
SUBLANES = 8
DEFAULT_TILE_BYTES = 4 * 1024 * 1024   # per input buffer (Pallas double-buffers it)
VMEM_LIMIT_BYTES = 32 * 1024 * 1024    # headroom for block-sized f32 temporaries


@functools.lru_cache(maxsize=1)
def _default_num_partitions():
    """2 on v7x (two TensorCores per chip), 1 on single-TC v5e / v6e."""
    try:
        kind = jax.devices()[0].device_kind.lower()
    except Exception:
        return 1
    return 2 if "7" in kind else 1


def _msl_kernel(x_ref, o_ref, *, block_rows, rows, blocks_per_part, total_blocks,
                needs_mask):
    """Accumulate sum of squares of one (block_rows, 128) tile into o_ref (1,8,128)."""
    p = pl.program_id(0)   # partition axis ("parallel"; one per TensorCore on v7x)
    i = pl.program_id(1)   # streaming / reduction axis ("arbitrary")

    @pl.when(i == 0)
    def _():
        o_ref[...] = jnp.zeros_like(o_ref)

    def accumulate(masked):
        x = x_ref[...].astype(jnp.float32)
        if masked:
            blk = p * blocks_per_part + i
            row0 = blk * block_rows
            row_ids = row0 + jax.lax.broadcasted_iota(jnp.int32, (block_rows, 1), 0)
            # Mask BEFORE squaring so garbage (even NaN/Inf) in the OOB tail of
            # the DMA'd edge block contributes exactly 0.
            x = jnp.where(row_ids < rows, x, 0.0)
        xsq = x * x
        # (block_rows,128) -> (g,8,128): groups align with (8,128) vreg tiles, so
        # the axis-0 sum is pure VPU vreg accumulation (no cross-lane work).
        partial = jnp.sum(xsq.reshape(block_rows // SUBLANES, SUBLANES, LANES), axis=0)
        o_ref[...] += partial[None]

    if needs_mask:
        blk = p * blocks_per_part + i
        # Steady state is completely mask-free; only the last real block pays the
        # iota+compare+select, and clamped duplicate blocks skip compute entirely.
        @pl.when(blk < total_blocks - 1)
        def _():
            accumulate(masked=False)

        @pl.when(blk == total_blocks - 1)
        def _():
            accumulate(masked=True)
        # blk > total_blocks - 1: duplicated (clamped) block -> no compute.
    else:
        accumulate(masked=False)


def msl(x, *, num_partitions=None, tile_bytes=None):
    """Mean of squared elements of x (any shape): sum(x**2) / numel(x)."""
    n_elems = int(x.size)
    if n_elems == 0:
        return jnp.array(jnp.nan, dtype=jnp.float32)    # torch: 0 / 0 -> nan

    flat = x.reshape(-1)                                # layout plumbing only (free)
    rows = n_elems // LANES

    # Ragged (numel % 128 != 0) or sub-slab (< 8 rows) inputs: a single fused XLA
    # square+reduce is already one HBM pass; padding or slicing a prefix for the
    # kernel would add a full extra HBM read+write pass, so plain JAX wins here.
    if n_elems % LANES != 0 or rows < SUBLANES:
        xf = flat.astype(jnp.float32)
        return (jnp.sum(xf * xf) / jnp.float32(n_elems)).astype(jnp.float32)

    if num_partitions is None:
        num_partitions = _default_num_partitions()
    if tile_bytes is None:
        tile_bytes = DEFAULT_TILE_BYTES

    slab = flat.reshape(rows, LANES)                    # zero-copy, lane-dense

    itemsize = jnp.dtype(x.dtype).itemsize
    # Dtype-aware streaming tile (~tile_bytes per buffer: f32 -> 8192 rows,
    # bf16 -> 16384 rows), a multiple of 8 sublanes, capped at the slab size.
    target_rows = max(SUBLANES,
                      (tile_bytes // (LANES * itemsize)) // SUBLANES * SUBLANES)
    block_rows = max(SUBLANES, min(target_rows, (rows // SUBLANES) * SUBLANES))
    total_blocks = pl.cdiv(rows, block_rows)
    num_parts = max(1, min(num_partitions, total_blocks))
    blocks_per_part = pl.cdiv(total_blocks, num_parts)
    needs_mask = (num_parts * blocks_per_part * block_rows) != rows

    if num_parts * blocks_per_part == total_blocks:
        def in_map(p, i):
            return (p * blocks_per_part + i, 0)
    else:
        # Clamp so the DMA never starts past the slab; the duplicated block is
        # skipped by the kernel (pl.when on blk >= total_blocks).
        def in_map(p, i):
            return (jnp.minimum(p * blocks_per_part + i, total_blocks - 1), 0)

    kernel = functools.partial(
        _msl_kernel,
        block_rows=block_rows, rows=rows, blocks_per_part=blocks_per_part,
        total_blocks=total_blocks, needs_mask=needs_mask)

    partials = pl.pallas_call(
        kernel,
        out_shape=jax.ShapeDtypeStruct((num_parts, SUBLANES, LANES), jnp.float32),
        grid_spec=pltpu.PrefetchScalarGridSpec(
            num_scalar_prefetch=0,
            grid=(num_parts, blocks_per_part),
            # Default double-buffering: with ~4 MiB tiles the per-step DMA time
            # far exceeds compute + fixed overhead, so depth-2 already hides it.
            in_specs=[pl.BlockSpec((block_rows, LANES), in_map)],
            out_specs=pl.BlockSpec((1, SUBLANES, LANES), lambda p, i: (p, 0, 0)),
        ),
        compiler_params=pltpu.CompilerParams(
            dimension_semantics=("parallel", "arbitrary"),
            vmem_limit_bytes=VMEM_LIMIT_BYTES,
        ),
        cost_estimate=pl.CostEstimate(
            flops=2 * rows * LANES,
            transcendentals=0,
            bytes_accessed=rows * LANES * itemsize + num_parts * SUBLANES * LANES * 4,
        ),
    )(slab)

    # Tiny final cross-lane reduce + division by the ORIGINAL element count.
    return (jnp.sum(partials) / jnp.float32(n_elems)).astype(jnp.float32)


if __name__ == "__main__":
    root = jax.random.PRNGKey(0)
    k1, k2, k3, k4, k5 = jax.random.split(root, 5)

    def ref_msl(v):
        vf = v.astype(jnp.float32)
        return jnp.sum(vf * vf) / jnp.float32(v.size)

    # 1) Small NCHW input from the module docstring: aligned, single-block path.
    x1 = jax.random.normal(k1, (2, 4, 16, 16), dtype=jnp.float32)
    o1 = jax.block_until_ready(msl(x1))
    assert jnp.allclose(o1, ref_msl(x1), rtol=1e-5, atol=1e-6), (o1, ref_msl(x1))

    # 2) Aligned but rows % block_rows != 0 (1536 elems = 12 rows): exercises the
    #    pl.when-gated masked tail block (garbage rows in the edge DMA zeroed).
    x2 = jax.random.normal(k2, (2, 3, 16, 16), dtype=jnp.float32)
    o2 = jax.block_until_ready(msl(x2))
    assert jnp.allclose(o2, ref_msl(x2), rtol=1e-5, atol=1e-6), (o2, ref_msl(x2))

    # 3) Forced 2-partition, many-block config via overrides: multi-step
    #    accumulation, imbalanced partition split and clamped duplicate-block
    #    skip, independent of which TPU generation runs the test.
    x3 = jax.random.normal(k3, (5, 6, 32, 32), dtype=jnp.float32)   # 240 rows
    o3 = jax.block_until_ready(msl(x3, num_partitions=2, tile_bytes=16 * LANES * 4))
    assert jnp.allclose(o3, ref_msl(x3), rtol=1e-5, atol=1e-6), (o3, ref_msl(x3))

    # 4) bf16 input: native-dtype streaming with in-kernel f32 upcast.
    x4 = jax.random.normal(k4, (2, 8, 128, 128), dtype=jnp.bfloat16)
    o4 = jax.block_until_ready(msl(x4))
    assert jnp.allclose(o4, ref_msl(x4), rtol=1e-3, atol=1e-3), (o4, ref_msl(x4))

    # 5) Ragged numel (not a multiple of 128): single-pass plain-JAX fallback.
    x5 = jax.random.normal(k5, (2, 3, 7, 5), dtype=jnp.float32)
    o5 = jax.block_until_ready(msl(x5))
    assert jnp.allclose(o5, ref_msl(x5), rtol=1e-5, atol=1e-6), (o5, ref_msl(x5))

    print("KERNEL_OK")
</pallas_src>

<mosaic_0001>
module attributes {stable_mosaic.version = 11 : i64} {
  func.func @_msl_kernel(%arg0: i32, %arg1: i32, %arg2: memref<16x128xf32, #tpu.memory_space<vmem>>, %arg3: memref<1x8x128xf32, #tpu.memory_space<vmem>>) attributes {dimension_semantics = [#tpu.dimension_semantics<parallel>, #tpu.dimension_semantics<arbitrary>], iteration_bounds = array<i64: 1, 1>, scalar_prefetch = 0 : i64, scratch_operands = 0 : i64, tpu.core_type = #tpu.core_type<tc>, window_params = [{transform_indices = @transform_0, window_bounds = array<i64: 16, 128>}, {transform_indices = @transform_1, window_bounds = array<i64: 1, 8, 128>}]} {
    %c0_i32 = arith.constant 0 : i32
    %0 = arith.cmpi eq, %arg1, %c0_i32 : i32
    %1 = arith.extui %0 : i1 to i32
    %c0_i32_0 = arith.constant 0 : i32
    %2 = arith.cmpi ne, %1, %c0_i32_0 : i32
    scf.if %2 {
      %cst_8 = arith.constant 0.000000e+00 : f32
      %11 = vector.broadcast %cst_8 : f32 to vector<1x8x128xf32>
      %c0_9 = arith.constant 0 : index
      %c0_10 = arith.constant 0 : index
      %c0_11 = arith.constant 0 : index
      %12 = vector.load %arg3[%c0_9, %c0_10, %c0_11] : memref<1x8x128xf32, #tpu.memory_space<vmem>>, vector<1x8x128xf32>
      tpu.vector_store %arg3[%c0_9, %c0_10, %c0_11], %11 {strides = array<i32>} : memref<1x8x128xf32, #tpu.memory_space<vmem>>, vector<1x8x128xf32>,
    } else {
    }
    %c0 = arith.constant 0 : index
    %c0_1 = arith.constant 0 : index
    %3 = vector.load %arg2[%c0, %c0_1] : memref<16x128xf32, #tpu.memory_space<vmem>>, vector<16x128xf32>
    %4 = arith.mulf %3, %3 : vector<16x128xf32>
    %5 = vector.shape_cast %4 : vector<16x128xf32> to vector<2x8x128xf32>
    %cst = arith.constant dense<0.000000e+00> : vector<8x128xf32>
    %6 = vector.multi_reduction <add>, %5, %cst [0] : vector<2x8x128xf32> to vector<8x128xf32>
    %c0_2 = arith.constant 0 : index
    %c0_3 = arith.constant 0 : index
    %c0_4 = arith.constant 0 : index
    %7 = vector.load %arg3[%c0_2, %c0_3, %c0_4] : memref<1x8x128xf32, #tpu.memory_space<vmem>>, vector<1x8x128xf32>
    %8 = vector.shape_cast %6 : vector<8x128xf32> to vector<1x8x128xf32>
    %9 = arith.addf %7, %8 : vector<1x8x128xf32>
    %c0_5 = arith.constant 0 : index
    %c0_6 = arith.constant 0 : index
    %c0_7 = arith.constant 0 : index
    %10 = vector.load %arg3[%c0_5, %c0_6, %c0_7] : memref<1x8x128xf32, #tpu.memory_space<vmem>>, vector<1x8x128xf32>
    tpu.vector_store %arg3[%c0_5, %c0_6, %c0_7], %9 {strides = array<i32>} : memref<1x8x128xf32, #tpu.memory_space<vmem>>, vector<1x8x128xf32>,
    return
  }
  func.func @transform_0(%arg0: i32, %arg1: i32) -> (i32, i32) {
    %c1_i32 = arith.constant 1 : i32
    %0 = arith.muli %arg0, %c1_i32 : i32
    %1 = arith.addi %0, %arg1 : i32
    %c0_i32 = arith.constant 0 : i32
    %c0_i32_0 = arith.constant 0 : i32
    return %1, %c0_i32 : i32, i32
  }
  func.func @transform_1(%arg0: i32, %arg1: i32) -> (i32, i32, i32) {
    %c0_i32 = arith.constant 0 : i32
    %c0_i32_0 = arith.constant 0 : i32
    %c0_i32_1 = arith.constant 0 : i32
    return %arg0, %c0_i32, %c0_i32_0 : i32, i32, i32
  }
}

</mosaic_0001>

<llo_original>
// kernel: tpu_custom_call.1
$region0: #{tpu_custom_call.1}
  #allocation0 [shape = 'u32[]', space=smem, size = 0x4, offset = 0x4, fixed_abs, tag = 'smem constant byte address 0x4 - core index']
  #allocation1 [shape = 'u32[72,128]{1,0:T(1,128)}', space=vmem, size = 0x9000, scoped, tag = 'internal scratch']
  %s0 = inlined_call_operand.hbm [shape: f32[16,128], index: 0, kind: input, shape index: {}]
  %s1 = inlined_call_operand.hbm [shape: f32[1,8,128], index: 1, kind: output, shape index: {}]
  %s2 = sld [smem:[#allocation0]]
  $region22: #{tpu_custom_call.1} parent=0
    _
  %s4 = ssub.s32 1, %s2
  %s5 = scalar_select 0, %s4, %s2
  $region1: #{tpu_custom_call.1} parent=0
    #allocation2 [shape = 'u8[8192]{0}', space=vmem, size = 0x2000, scoped, tag = 'input window, operand 0, single buffered']
    #allocation3 [shape = 's32[1]{0}', space=sflag, size = 0x4, scoped, tag = 'scoped memory for tpu_custom_call.1']
    #allocation4 [shape = 's32[1]{0}', space=sflag, size = 0x4, scoped, tag = 'scoped memory for tpu_custom_call.1']
    #allocation5 [shape = 'u8[4096]{0}', space=vmem, size = 0x1000, scoped, tag = 'output window, operand 0, single buffered']
    %6 = vsyncpa [#allocation3], 0
    %7 = vsyncpa [#allocation4], 0
    // Predicated region
    $region2: #{tpu_custom_call.1} parent=1 // pred_check
      _
    $region3: #{tpu_custom_call.1} parent=1 // pred_check_branch
      %9 = sbr.rel (0) target = $region5
    $region4: #{tpu_custom_call.1} parent=1 // pred_region
      %s10 = sadd.s32 0, 0
      %s11 = smul.u32 2, %s10
      %13 = vsyncadd [#allocation3], 0
      %s14 = smul.addr %s11, 8
      %s15 = scalar_lea.hbm %s0, %s14
      %s16 = sshll.u32 %s15, 4
      %s17 = int_to_ptr.hbm [resolvable:$true] %s16
      %s18 = sshll.u32 [#allocation2], 4
      %s19 = int_to_ptr.vmem [resolvable:$true] %s18
      %24 = dma.hbm_to_vmem [thread:$0]  %s17, 256, %s19, [#allocation3], 128, 128, 8
    $region5: #{tpu_custom_call.1} parent=1 // pred_fallthru
      _
    // Predicated region
    $region6: #{tpu_custom_call.1} parent=1 // pred_check
      _
    $region7: #{tpu_custom_call.1} parent=1 // pred_check_branch
      %26 = sbr.rel (0) target = $region9
    $region8: #{tpu_custom_call.1} parent=1 // pred_region
      %28 = dma.done [#allocation3], 256
    $region9: #{tpu_custom_call.1} parent=1 // pred_fallthru
      _
    %s29 = sadd.s32 0, 0
    %s30 = smul.u32 2, %s29
    %p31 = scmp.eq.s32.totalorder 0, 0
    // Predicated region
    $region10: #{tpu_custom_call.1} parent=1 // pred_check
      %p32 = pneg %p31
    $region11: #{tpu_custom_call.1} parent=1 // pred_check_branch
      %34 = sbr.rel (%p32) target = $region13
    $region12: #{tpu_custom_call.1} parent=1 // pred_region
      %35 = vst [vmem:[#allocation5] sm:$0xff] 0.0
    $region13: #{tpu_custom_call.1} parent=1 // pred_fallthru
      _
    %v36 = vld [vmem:[#allocation2] sm:$0xff]
    %v37 = vld [vmem:[#allocation2 + $0x8] sm:$0xff]
    %v38 = vmul.f32 %v36, %v36
    %v39 = vmul.f32 %v37, %v37
    %v40 = vadd.f32 %v38, %v39
    %v41 = vld [vmem:[#allocation5] sm:$0xff]
    %v42 = vadd.f32 %v41, %v40
    %43 = vst [vmem:[#allocation5] sm:$0xff] %v42
    // Predicated region
    $region14: #{tpu_custom_call.1} parent=1 // pred_check
      _
    $region15: #{tpu_custom_call.1} parent=1 // pred_check_branch
      %45 = sbr.rel (0) target = $region17
    $region16: #{tpu_custom_call.1} parent=1 // pred_region
      %47 = vsyncadd [#allocation4], 0
      %s49 = sshll.u32 [#allocation5], 4
      %s50 = int_to_ptr.vmem [resolvable:$true] %s49
      %s51 = sshll.u32 %s1, 4
      %s52 = int_to_ptr.hbm [resolvable:$true] %s51
      %54 = dma.vmem_to_hbm [thread:$0]  %s50, 128, %s52, [#allocation4]
    $region17: #{tpu_custom_call.1} parent=1 // pred_fallthru
      _
    // Predicated region
    $region18: #{tpu_custom_call.1} parent=1 // pred_check
      _
    $region19: #{tpu_custom_call.1} parent=1 // pred_check_branch
      %56 = sbr.rel (0) target = $region21
    $region20: #{tpu_custom_call.1} parent=1 // pred_region
      %58 = dma.done [#allocation4], 128
    $region21: #{tpu_custom_call.1} parent=1 // pred_fallthru
      _
    %59 = vsyncpa [#allocation3], 1
    %60 = vsyncpa [#allocation4], 1

</llo_original>
